<compile_context>
chip_gen: v5e
topology: v5e:2x2
jax: 0.10.0
libtpu: 0.0.40
codegen_flags: <defaults>
</compile_context>

<pallas_src>
from types import SimpleNamespace

import jax
import jax.numpy as jnp
from jax.experimental import pallas as pl
from jax.experimental.pallas import tpu as pltpu


# ------------------------------ Pallas kernels ------------------------------

def _proj_kernel(e_ref, w2_ref, uv_ref):
    """uv = E_tile @ [Wc | We]  -> (TN, 2): col 0 subject half, col 1 object half."""
    uv_ref[...] = jnp.dot(e_ref[...], w2_ref[...],
                          preferred_element_type=jnp.float32)


def _rel_reduce_kernel(u_ref, v_ref, w_ref, out_ref, acc_ref):
    """Fused relation-score construction + weighted max-reduce over objects.

    Wrapper pre-halves everything so sigmoid is one tanh EUP push:
        s_ij   = sigmoid(u_i + r@Wc + v_j + b) = 0.5*tanh(x_half_ij) + 0.5
        x_half = u_ref + v_ref     (u_ref = 0.5*u_i ; v_ref = 0.5*(v_j + r@Wc + b))
        out_i  = max_j s_ij * w_j  = max_j w_half_j * (tanh(x_half_ij) + 1)
    Padded object lanes carry v = -inf -> tanh = -1 -> contribution exactly 0
    (reduction-neutral since all valid contributions are in [0, 1]); no in-kernel mask.
    exist : weights w = c,     result = out
    forall: weights w = 1 - c, result = 1 - out   ((1-s)+c-(1-s)c == 1 - s*(1-c))
    """
    j = pl.program_id(1)

    @pl.when(j == 0)
    def _():
        acc_ref[...] = jnp.zeros_like(acc_ref)      # all contributions >= 0

    t = jnp.tanh(u_ref[...] + v_ref[...])           # (TM, TN) score tile, VMEM only
    val = w_ref[...] * (t + 1.0)                    # == s * w
    acc_ref[...] = jnp.maximum(acc_ref[...],
                               jnp.max(val, axis=1, keepdims=True))

    @pl.when(j == pl.num_programs(1) - 1)
    def _():
        out_ref[...] = acc_ref[...]


# ------------------------------ parsing helpers ------------------------------

def get_rights(right):
    ridges = []
    axiom_parts = right.split(' ')
    counter = 0
    for i, part in enumerate(axiom_parts):
        counter += part.count('(')
        counter -= part.count(')')
        if counter == 0:
            ridges.append(i)
    if len(ridges) == 1:
        return [right]
    elif len(ridges) > 1:
        rights = []
        for i in range(len(ridges)):
            if i == 0:
                rights.append(' '.join(axiom_parts[:ridges[0] + 1]))
            else:
                rights.append(' '.join(axiom_parts[ridges[i - 1] + 1:ridges[i] + 1]))
        return rights
    else:
        raise ValueError


def _split_nary(axiom, prefix_len):
    axiom_parts = axiom.split(' ')
    counter = 0
    ridge = None
    for i, part in enumerate(axiom_parts):
        counter += part.count('(')
        counter -= part.count(')')
        if counter == 1:
            ridge = i
            break
    left = ' '.join(axiom_parts[:ridge + 1])[prefix_len:]
    right = ' '.join(axiom_parts[ridge + 1:])[:-1]
    return left, get_rights(right)


# ------------------------------ model ------------------------------

def _xavier_uniform(key, shape):
    bound = jnp.sqrt(6.0 / (shape[0] + shape[1]))
    return jax.random.uniform(key, shape, jnp.float32, -bound, bound)


class FalconPallas:
    """JAX/Pallas port of FALCON.forward (product t-norm, notCorD residuum, max)."""

    def __init__(self, c_dict, e_dict, r_dict, cfg, key):
        self.c_dict, self.e_dict, self.r_dict, self.cfg = c_dict, e_dict, r_dict, cfg
        self.n_entity = len(e_dict) + cfg.anon_e
        self.n_pad = ((self.n_entity + 127) // 128) * 128   # lane-dense carrier width
        D = cfg.emb_dim
        kc, kr, ke, kw, kb = jax.random.split(key, 5)
        self.c_emb = _xavier_uniform(kc, (len(c_dict), D))
        self.r_emb = _xavier_uniform(kr, (len(r_dict), D))
        self.e_emb = _xavier_uniform(ke, (len(e_dict), D))
        self.fc_w = _xavier_uniform(kw, (1, 2 * D))          # torch Linear weight (1, 2D)
        self.fc_b = jax.random.uniform(kb, (1,), jnp.float32, -0.1, 0.1)
        # fc_0 split into subject (Wc) / object (We) halves; fused into one (D, 2) matmul.
        self.wc_vec = self.fc_w[0, :D]                                   # (D,)
        self.w2 = jnp.stack([self.fc_w[0, :D], self.fc_w[0, D:]], axis=1)  # (D, 2)
        self.nothing = jnp.zeros((1, self.n_pad), jnp.float32)

        # Relation-kernel tiles: subject rows (TM) x object lanes (TN).
        # TM = 128 always divides n_pad and keeps >= 2 subject tiles whenever
        # n_pad >= 256 so the "parallel" axis actually splits across TCs.
        # TN grows while the (TM, TN) f32 score tile stays <= 8 MiB (well inside
        # the explicit 32 MiB VMEM limit, portable down to v7x's 64 MiB VMEM).
        self.tm = 128
        tn = 128
        while (tn * 2 <= self.n_pad and self.n_pad % (tn * 2) == 0
               and self.tm * (tn * 2) * 4 <= (8 << 20)):
            tn *= 2
        self.tn = tn

        # Projection tile over the entity axis (keeps e_pad blocks small on v5e).
        tp = 128
        while (tp * 2 <= self.n_pad and self.n_pad % (tp * 2) == 0
               and (tp * 2) * D * 4 <= (2 << 20)):
            tp *= 2
        self.tproj = tp

        self._vmem_limit = 32 * 1024 * 1024

    # ---- Pallas wrappers ----
    def _project(self, e_pad):
        """uv[:, 0] = E@Wc (subject axis), uv[:, 1] = E@We (object axis)."""
        D = self.cfg.emb_dim
        tp = self.tproj
        return pl.pallas_call(
            _proj_kernel,
            grid=(self.n_pad // tp,),
            out_shape=jax.ShapeDtypeStruct((self.n_pad, 2), jnp.float32),
            in_specs=[pl.BlockSpec((tp, D), lambda i: (i, 0)),
                      pl.BlockSpec((D, 2), lambda i: (0, 0))],
            out_specs=pl.BlockSpec((tp, 2), lambda i: (i, 0)),
            compiler_params=pltpu.CompilerParams(
                dimension_semantics=("parallel",),
                vmem_limit_bytes=self._vmem_limit),
        )(e_pad, self.w2)

    def _rel_reduce(self, u_half, v_node_half, w_half):
        """out[i] = max_j sigmoid(u_i + shift + v_j) * w_j  as a (1, N_pad) row."""
        np_, tm, tn = self.n_pad, self.tm, self.tn
        col = pl.pallas_call(
            _rel_reduce_kernel,
            grid=(np_ // tm, np_ // tn),
            out_shape=jax.ShapeDtypeStruct((np_, 1), jnp.float32),
            in_specs=[
                pl.BlockSpec((tm, 1), lambda i, j: (i, 0)),   # 0.5*u subject tile
                pl.BlockSpec((1, tn), lambda i, j: (0, j)),   # 0.5*(v + shift), masked
                pl.BlockSpec((1, tn), lambda i, j: (0, j)),   # 0.5*w child weights
            ],
            out_specs=pl.BlockSpec((tm, 1), lambda i, j: (i, 0)),
            scratch_shapes=[pltpu.VMEM((tm, 1), jnp.float32)],
            compiler_params=pltpu.CompilerParams(
                dimension_semantics=("parallel", "arbitrary"),
                vmem_limit_bytes=self._vmem_limit),
        )(u_half, v_node_half, w_half)
        # TODO(synk): a lane-dense (1, TM) in-kernel store would drop this tiny
        # per-node reshape; kept as a column store for robust Mosaic lowering.
        return col.reshape(1, np_)

    # ---- tiny (1, N_pad) combinators: plain jnp so XLA fuses them ----
    @staticmethod
    def _and(x, y):
        return x * y

    @staticmethod
    def _or(x, y):
        return x + y - x * y

    @staticmethod
    def _not(x):
        return 1.0 - x

    # ---- recursive forward (string parsing is trace-time Python glue) ----
    def forward(self, axiom, anon_e_emb):
        D = self.cfg.emb_dim
        pad = self.n_pad - self.n_entity
        e_pad = jnp.concatenate(
            [self.e_emb, anon_e_emb, jnp.zeros((pad, D), jnp.float32)], axis=0)

        uv = self._project(e_pad)                       # only matmul touching E
        u_half = 0.5 * uv[:, 0:1]                       # (N_pad, 1) subject half, tanh-scaled
        v_raw = uv[:, 1].reshape(1, self.n_pad)         # (1, N_pad) object half, lane-dense
        lane = jnp.arange(self.n_pad)[None, :]
        # Bake the padding mask: padded lanes -> -inf -> sigmoid exactly 0 everywhere.
        v_masked = jnp.where(lane < self.n_entity, v_raw, -jnp.inf)
        v_half = 0.5 * v_masked

        # All concept / relation shift scalars in two tiny matvecs, once per forward.
        c_shifts = self.c_emb @ self.wc_vec + self.fc_b[0]   # (n_concepts,)
        r_shifts = self.r_emb @ self.wc_vec + self.fc_b[0]   # (n_relations,)

        ctx = (u_half, v_masked, v_half, c_shifts, r_shifts)
        fs = self._forward(axiom, ctx)                  # (1, n_pad)
        return fs[0, :self.n_entity]

    def _forward(self, axiom, ctx):
        u_half, v_masked, v_half, c_shifts, r_shifts = ctx
        if axiom[0] == '<' or axiom == 'owl:Thing':
            # c_fs[j] = sigmoid(c@Wc + b + e_j@We); plain jnp so XLA fuses it.
            return jax.nn.sigmoid(v_masked + c_shifts[self.c_dict[axiom]])
        elif axiom == 'owl:Nothing':
            return self.nothing
        elif axiom[:21] == 'ObjectIntersectionOf(':
            left, rights = _split_nary(axiom, 21)
            ret = self._and(self._forward(left, ctx), self._forward(rights[0], ctx))
            for r in rights[1:]:
                ret = self._and(ret, self._forward(r, ctx))
            return ret
        elif axiom[:14] == 'ObjectUnionOf(':
            left, rights = _split_nary(axiom, 14)
            ret = self._or(self._forward(left, ctx), self._forward(rights[0], ctx))
            for r in rights[1:]:
                ret = self._or(ret, self._forward(r, ctx))
            return ret
        elif axiom[:22] == 'ObjectSomeValuesFrom(<':
            parts = axiom.split(' ')
            shift = r_shifts[self.r_dict[parts[0][21:]]]
            right = ' '.join(parts[1:])[:-1]
            cfs = self._forward(right, ctx)
            v_node = v_half + 0.5 * shift            # fold r@Wc + b into the object row
            w_half = 0.5 * cfs                       # exist weights: c
            return self._rel_reduce(u_half, v_node, w_half)          # max_j s*c
        elif axiom[:21] == 'ObjectAllValuesFrom(<':
            parts = axiom.split(' ')
            shift = r_shifts[self.r_dict[parts[0][20:]]]
            right = ' '.join(parts[1:])[:-1]
            cfs = self._forward(right, ctx)
            v_node = v_half + 0.5 * shift
            w_half = 0.5 * (1.0 - cfs)               # forall weights: 1 - c
            return 1.0 - self._rel_reduce(u_half, v_node, w_half)    # 1 - max_j s*(1-c)
        elif axiom[:19] == 'ObjectComplementOf(':
            return self._not(self._forward(axiom[19:-1], ctx))
        else:
            raise ValueError(axiom)


# ------------------------------ pure-JAX reference ------------------------------

def _ref_forward(model, axiom, e_all):
    W, b = model.fc_w, model.fc_b
    N, D = e_all.shape

    def c_fs(c_vec):
        emb = jnp.concatenate([jnp.broadcast_to(c_vec, e_all.shape), e_all], axis=-1)
        return jax.nn.sigmoid(emb @ W.T + b)[:, 0]

    def r_fs(r_vec):
        l = jnp.broadcast_to((e_all + r_vec)[:, None, :], (N, N, D))
        rr = jnp.broadcast_to(e_all[None, :, :], (N, N, D))
        emb = jnp.concatenate([l, rr], axis=-1)
        return jax.nn.sigmoid(emb @ W.T + b)[:, :, 0]

    def rec(ax):
        if ax[0] == '<' or ax == 'owl:Thing':
            return c_fs(model.c_emb[model.c_dict[ax]])
        elif ax == 'owl:Nothing':
            return jnp.zeros((N,), jnp.float32)
        elif ax[:21] == 'ObjectIntersectionOf(':
            left, rights = _split_nary(ax, 21)
            ret = rec(left) * rec(rights[0])
            for r in rights[1:]:
                ret = ret * rec(r)
            return ret
        elif ax[:14] == 'ObjectUnionOf(':
            left, rights = _split_nary(ax, 14)
            def lor(x, y): return x + y - x * y
            ret = lor(rec(left), rec(rights[0]))
            for r in rights[1:]:
                ret = lor(ret, rec(r))
            return ret
        elif ax[:22] == 'ObjectSomeValuesFrom(<':
            parts = ax.split(' ')
            rf = r_fs(model.r_emb[model.r_dict[parts[0][21:]]])
            cf = rec(' '.join(parts[1:])[:-1])
            return jnp.max(rf * cf[None, :], axis=-1)
        elif ax[:21] == 'ObjectAllValuesFrom(<':
            parts = ax.split(' ')
            rf = r_fs(model.r_emb[model.r_dict[parts[0][20:]]])
            cf = rec(' '.join(parts[1:])[:-1])
            nr = 1.0 - rf
            res = nr + cf[None, :] - nr * cf[None, :]
            return jnp.min(res, axis=-1)
        elif ax[:19] == 'ObjectComplementOf(':
            return 1.0 - rec(ax[19:-1])
        else:
            raise ValueError(ax)

    return rec(axiom)


# ------------------------------ main ------------------------------

if __name__ == "__main__":
    cfg = SimpleNamespace(emb_dim=32, anon_e=8, t_norm='product',
                          residuum='notCorD', max_measure='max')
    e_dict = {f'<e{i}>': i for i in range(24)}
    c_dict = {'owl:Thing': 0, '<c0>': 1, '<c1>': 2, '<c2>': 3}
    r_dict = {'<r0>': 0, '<r1>': 1}

    key = jax.random.PRNGKey(0)
    model = FalconPallas(c_dict, e_dict, r_dict, cfg, key)

    anon_e_emb = 0.1 * jax.random.normal(jax.random.PRNGKey(1),
                                         (cfg.anon_e, cfg.emb_dim), jnp.float32)

    axiom = ('ObjectIntersectionOf(<c0> '
             'ObjectUnionOf(ObjectComplementOf(<c2>) ObjectSomeValuesFrom(<r0> <c1>)) '
             'ObjectAllValuesFrom(<r1> owl:Thing))')

    # Whole forward under one jit: axiom parsing happens at trace time, the jnp
    # combinators / shifts fuse, and only the projection + fused relation kernels run.
    fwd = jax.jit(lambda anon: model.forward(axiom, anon))
    out = jax.block_until_ready(fwd(anon_e_emb))

    e_all = jnp.concatenate([model.e_emb, anon_e_emb], axis=0)
    ref = jax.block_until_ready(_ref_forward(model, axiom, e_all))

    assert out.shape == (model.n_entity,), out.shape
    assert jnp.allclose(out, ref, atol=1e-4), (out, ref)
    print("KERNEL_OK")
</pallas_src>

<mosaic_0001>
module attributes {stable_mosaic.version = 11 : i64} {
  func.func @_rel_reduce_kernel(%arg0: i32, %arg1: i32, %arg2: memref<128x1xf32, #tpu.memory_space<vmem>>, %arg3: memref<1x128xf32, #tpu.memory_space<vmem>>, %arg4: memref<1x128xf32, #tpu.memory_space<vmem>>, %arg5: memref<128x1xf32, #tpu.memory_space<vmem>>, %arg6: memref<128x1xf32, #tpu.memory_space<vmem>>) attributes {dimension_semantics = [#tpu.dimension_semantics<parallel>, #tpu.dimension_semantics<arbitrary>], iteration_bounds = array<i64: 1, 1>, scalar_prefetch = 0 : i64, scratch_operands = 1 : i64, tpu.core_type = #tpu.core_type<tc>, window_params = [{transform_indices = @transform_0, window_bounds = array<i64: 128, 1>}, {transform_indices = @transform_1, window_bounds = array<i64: 1, 128>}, {transform_indices = @transform_2, window_bounds = array<i64: 1, 128>}, {transform_indices = @transform_3, window_bounds = array<i64: 128, 1>}]} {
    %c0_i32 = arith.constant 0 : i32
    %0 = arith.cmpi eq, %arg1, %c0_i32 : i32
    %1 = arith.extui %0 : i1 to i32
    %c0_i32_0 = arith.constant 0 : i32
    %2 = arith.cmpi ne, %1, %c0_i32_0 : i32
    scf.if %2 {
      %cst_13 = arith.constant 0.000000e+00 : f32
      %22 = vector.broadcast %cst_13 : f32 to vector<128x1xf32>
      %c0_14 = arith.constant 0 : index
      %c0_15 = arith.constant 0 : index
      %23 = vector.load %arg6[%c0_14, %c0_15] : memref<128x1xf32, #tpu.memory_space<vmem>>, vector<128x1xf32>
      tpu.vector_store %arg6[%c0_14, %c0_15], %22 {strides = array<i32>} : memref<128x1xf32, #tpu.memory_space<vmem>>, vector<128x1xf32>,
    } else {
    }
    %c0 = arith.constant 0 : index
    %c0_1 = arith.constant 0 : index
    %3 = vector.load %arg2[%c0, %c0_1] : memref<128x1xf32, #tpu.memory_space<vmem>>, vector<128x1xf32>
    %c0_2 = arith.constant 0 : index
    %c0_3 = arith.constant 0 : index
    %4 = vector.load %arg3[%c0_2, %c0_3] : memref<1x128xf32, #tpu.memory_space<vmem>>, vector<1x128xf32>
    %5 = vector.broadcast %3 : vector<128x1xf32> to vector<128x128xf32>
    %6 = vector.broadcast %4 : vector<1x128xf32> to vector<128x128xf32>
    %7 = arith.addf %5, %6 : vector<128x128xf32>
    %8 = math.tanh %7 : vector<128x128xf32>
    %c0_4 = arith.constant 0 : index
    %c0_5 = arith.constant 0 : index
    %9 = vector.load %arg4[%c0_4, %c0_5] : memref<1x128xf32, #tpu.memory_space<vmem>>, vector<1x128xf32>
    %cst = arith.constant 1.000000e+00 : f32
    %10 = vector.broadcast %cst : f32 to vector<128x128xf32>
    %11 = arith.addf %8, %10 : vector<128x128xf32>
    %12 = vector.broadcast %9 : vector<1x128xf32> to vector<128x128xf32>
    %13 = arith.mulf %12, %11 : vector<128x128xf32>
    %c0_6 = arith.constant 0 : index
    %c0_7 = arith.constant 0 : index
    %14 = vector.load %arg6[%c0_6, %c0_7] : memref<128x1xf32, #tpu.memory_space<vmem>>, vector<128x1xf32>
    %cst_8 = arith.constant dense<0xFF800000> : vector<128xf32>
    %15 = vector.multi_reduction <maximumf>, %13, %cst_8 [1] : vector<128x128xf32> to vector<128xf32>
    %16 = vector.shape_cast %15 : vector<128xf32> to vector<128x1xf32>
    %17 = arith.maximumf %14, %16 : vector<128x1xf32>
    %c0_9 = arith.constant 0 : index
    %c0_10 = arith.constant 0 : index
    %18 = vector.load %arg6[%c0_9, %c0_10] : memref<128x1xf32, #tpu.memory_space<vmem>>, vector<128x1xf32>
    tpu.vector_store %arg6[%c0_9, %c0_10], %17 {strides = array<i32>} : memref<128x1xf32, #tpu.memory_space<vmem>>, vector<128x1xf32>,
    %c0_i32_11 = arith.constant 0 : i32
    %19 = arith.cmpi eq, %arg1, %c0_i32_11 : i32
    %20 = arith.extui %19 : i1 to i32
    %c0_i32_12 = arith.constant 0 : i32
    %21 = arith.cmpi ne, %20, %c0_i32_12 : i32
    scf.if %21 {
      %c0_13 = arith.constant 0 : index
      %c0_14 = arith.constant 0 : index
      %22 = vector.load %arg6[%c0_13, %c0_14] : memref<128x1xf32, #tpu.memory_space<vmem>>, vector<128x1xf32>
      %c0_15 = arith.constant 0 : index
      %c0_16 = arith.constant 0 : index
      %23 = vector.load %arg5[%c0_15, %c0_16] : memref<128x1xf32, #tpu.memory_space<vmem>>, vector<128x1xf32>
      tpu.vector_store %arg5[%c0_15, %c0_16], %22 {strides = array<i32>} : memref<128x1xf32, #tpu.memory_space<vmem>>, vector<128x1xf32>,
    } else {
    }
    return
  }
  func.func @transform_0(%arg0: i32, %arg1: i32) -> (i32, i32) {
    %c0_i32 = arith.constant 0 : i32
    %c0_i32_0 = arith.constant 0 : i32
    return %arg0, %c0_i32 : i32, i32
  }
  func.func @transform_1(%arg0: i32, %arg1: i32) -> (i32, i32) {
    %c0_i32 = arith.constant 0 : i32
    %c0_i32_0 = arith.constant 0 : i32
    return %c0_i32, %arg1 : i32, i32
  }
  func.func @transform_2(%arg0: i32, %arg1: i32) -> (i32, i32) {
    %c0_i32 = arith.constant 0 : i32
    %c0_i32_0 = arith.constant 0 : i32
    return %c0_i32, %arg1 : i32, i32
  }
  func.func @transform_3(%arg0: i32, %arg1: i32) -> (i32, i32) {
    %c0_i32 = arith.constant 0 : i32
    %c0_i32_0 = arith.constant 0 : i32
    return %arg0, %c0_i32 : i32, i32
  }
}

module attributes {stable_mosaic.version = 11 : i64} {
  func.func @_proj_kernel(%arg0: i32, %arg1: memref<128x32xf32, #tpu.memory_space<vmem>>, %arg2: memref<32x2xf32, #tpu.memory_space<vmem>>, %arg3: memref<128x2xf32, #tpu.memory_space<vmem>>) attributes {dimension_semantics = [#tpu.dimension_semantics<parallel>], iteration_bounds = array<i64: 1>, scalar_prefetch = 0 : i64, scratch_operands = 0 : i64, tpu.core_type = #tpu.core_type<tc>, window_params = [{transform_indices = @transform_0, window_bounds = array<i64: 128, 32>}, {pipeline_mode = #tpu.pipeline_mode<synchronous>, transform_indices = @transform_1, window_bounds = array<i64: 32, 2>}, {transform_indices = @transform_2, window_bounds = array<i64: 128, 2>}]} {
    %c0 = arith.constant 0 : index
    %c0_0 = arith.constant 0 : index
    %0 = vector.load %arg1[%c0, %c0_0] : memref<128x32xf32, #tpu.memory_space<vmem>>, vector<128x32xf32>
    %c0_1 = arith.constant 0 : index
    %c0_2 = arith.constant 0 : index
    %1 = vector.load %arg2[%c0_1, %c0_2] : memref<32x2xf32, #tpu.memory_space<vmem>>, vector<32x2xf32>
    %cst = arith.constant dense<0.000000e+00> : vector<128x2xf32>
    %2 = tpu.matmul %0, %1, %cst {dimension_numbers = #tpu.dot_dimension_numbers<[1], [0], [0], [1], [0, 0, 1, 1], [], []>} : vector<128x32xf32>, vector<32x2xf32>, vector<128x2xf32> -> vector<128x2xf32>
    %c0_3 = arith.constant 0 : index
    %c0_4 = arith.constant 0 : index
    %3 = vector.load %arg3[%c0_3, %c0_4] : memref<128x2xf32, #tpu.memory_space<vmem>>, vector<128x2xf32>
    tpu.vector_store %arg3[%c0_3, %c0_4], %2 {strides = array<i32>} : memref<128x2xf32, #tpu.memory_space<vmem>>, vector<128x2xf32>,
    return
  }
  func.func @transform_0(%arg0: i32) -> (i32, i32) {
    %c0_i32 = arith.constant 0 : i32
    %c0_i32_0 = arith.constant 0 : i32
    return %arg0, %c0_i32 : i32, i32
  }
  func.func @transform_1(%arg0: i32) -> (i32, i32) {
    %c0_i32 = arith.constant 0 : i32
    %c0_i32_0 = arith.constant 0 : i32
    %c0_i32_1 = arith.constant 0 : i32
    return %c0_i32, %c0_i32_0 : i32, i32
  }
  func.func @transform_2(%arg0: i32) -> (i32, i32) {
    %c0_i32 = arith.constant 0 : i32
    %c0_i32_0 = arith.constant 0 : i32
    return %arg0, %c0_i32 : i32, i32
  }
}

</mosaic_0001>

<llo_original>
// kernel: _lambda_.4
$region0: #{_lambda_.4}
  #allocation0 [shape = 'u32[]', space=smem, size = 0x4, offset = 0x4, fixed_abs, tag = 'smem constant byte address 0x4 - core index']
  #allocation1 [shape = 'u32[72,128]{1,0:T(1,128)}', space=vmem, size = 0x9000, scoped, tag = 'internal scratch']
  #allocation2 [shape = 'f32[128,1]{1,0:T(8,128)}', space=vmem, size = 0x10000, scoped, tag = 'scratch operand']
  %s0 = inlined_call_operand.vmem [shape: f32[128,1], index: 0, kind: input, shape index: {}]
  %s1 = inlined_call_operand.vmem [shape: f32[1,128], index: 1, kind: input, shape index: {}]
  %s2 = inlined_call_operand.vmem [shape: f32[1,128], index: 2, kind: input, shape index: {}]
  %s3 = inlined_call_operand.vmem [shape: f32[128,1], index: 3, kind: output, shape index: {}]
  %s4 = sld [smem:[#allocation0]]
  $region30: #{_lambda_.4} parent=0
    _
  %s6 = ssub.s32 1, %s4
  %s7 = scalar_select 0, %s6, %s4
  // Predicated region
  $region2: #{_lambda_.4} parent=0 // pred_check
    _
  $region3: #{_lambda_.4} parent=0 // pred_check_branch
    %9 = sbr.rel (0) target = $region5
  $region4: #{_lambda_.4} parent=0 // pred_region
    _
  $region5: #{_lambda_.4} parent=0 // pred_fallthru
    _
  // Predicated region
  $region6: #{_lambda_.4} parent=0 // pred_check
    _
  $region7: #{_lambda_.4} parent=0 // pred_check_branch
    %11 = sbr.rel (0) target = $region9
  $region8: #{_lambda_.4} parent=0 // pred_region
    _
  $region9: #{_lambda_.4} parent=0 // pred_fallthru
    _
  // Predicated region
  $region10: #{_lambda_.4} parent=0 // pred_check
    _
  $region11: #{_lambda_.4} parent=0 // pred_check_branch
    %13 = sbr.rel (0) target = $region13
  $region12: #{_lambda_.4} parent=0 // pred_region
    _
  $region13: #{_lambda_.4} parent=0 // pred_fallthru
    _
  %p14 = scmp.eq.s32.totalorder 0, 0
  // Predicated region
  $region14: #{_lambda_.4} parent=0 // pred_check
    %p15 = pneg %p14
  $region15: #{_lambda_.4} parent=0 // pred_check_branch
    %17 = sbr.rel (%p15) target = $region17
  $region16: #{_lambda_.4} parent=0 // pred_region
    %vm18 = vcmask 7168
    %19 = vst.msk [vmem:[#allocation2] sm:$0xff] %vm18, 0.0
    %20 = vst.msk [vmem:[#allocation2 + $0x8] sm:$0xff] %vm18, 0.0
    %21 = vst.msk [vmem:[#allocation2 + $0x10] sm:$0xff] %vm18, 0.0
    %22 = vst.msk [vmem:[#allocation2 + $0x18] sm:$0xff] %vm18, 0.0
    %23 = vst.msk [vmem:[#allocation2 + $0x20] sm:$0xff] %vm18, 0.0
    %24 = vst.msk [vmem:[#allocation2 + $0x28] sm:$0xff] %vm18, 0.0
    %25 = vst.msk [vmem:[#allocation2 + $0x30] sm:$0xff] %vm18, 0.0
    %26 = vst.msk [vmem:[#allocation2 + $0x38] sm:$0xff] %vm18, 0.0
    %27 = vst.msk [vmem:[#allocation2 + $0x40] sm:$0xff] %vm18, 0.0
    %28 = vst.msk [vmem:[#allocation2 + $0x48] sm:$0xff] %vm18, 0.0
    %29 = vst.msk [vmem:[#allocation2 + $0x50] sm:$0xff] %vm18, 0.0
    %30 = vst.msk [vmem:[#allocation2 + $0x58] sm:$0xff] %vm18, 0.0
    %31 = vst.msk [vmem:[#allocation2 + $0x60] sm:$0xff] %vm18, 0.0
    %32 = vst.msk [vmem:[#allocation2 + $0x68] sm:$0xff] %vm18, 0.0
    %33 = vst.msk [vmem:[#allocation2 + $0x70] sm:$0xff] %vm18, 0.0
    %34 = vst.msk [vmem:[#allocation2 + $0x78] sm:$0xff] %vm18, 0.0
  $region17: #{_lambda_.4} parent=0 // pred_fallthru
    _
  %v35 = vld [vmem:[%s0] sm:$0xff]
  %v36 = vld [vmem:[%s0 + $0x8] sm:$0xff]
  %v37 = vld [vmem:[%s0 + $0x10] sm:$0xff]
  %v38 = vld [vmem:[%s0 + $0x18] sm:$0xff]
  %v39 = vld [vmem:[%s0 + $0x20] sm:$0xff]
  %v40 = vld [vmem:[%s0 + $0x28] sm:$0xff]
  %v41 = vld [vmem:[%s0 + $0x30] sm:$0xff]
  %v42 = vld [vmem:[%s0 + $0x38] sm:$0xff]
  %v43 = vld [vmem:[%s0 + $0x40] sm:$0xff]
  %v44 = vld [vmem:[%s0 + $0x48] sm:$0xff]
  %v45 = vld [vmem:[%s0 + $0x50] sm:$0xff]
  %v46 = vld [vmem:[%s0 + $0x58] sm:$0xff]
  %v47 = vld [vmem:[%s0 + $0x60] sm:$0xff]
  %v48 = vld [vmem:[%s0 + $0x68] sm:$0xff]
  %v49 = vld [vmem:[%s0 + $0x70] sm:$0xff]
  %v50 = vld [vmem:[%s0 + $0x78] sm:$0xff]
  %v51 = vld [vmem:[%s1] sm:$0x1]
  %53 = vset.pattern.permute.xlu0 0
  %54 = vperm.xlu0 %53, %v35
  %v55 = vpop.permute.xlu0 %54
  %58 = vset.pattern.permute.xlu0 0
  %59 = vperm.xlu0 %58, %v36
  %v60 = vpop.permute.xlu0 %59
  %63 = vset.pattern.permute.xlu0 0
  %64 = vperm.xlu0 %63, %v37
  %v65 = vpop.permute.xlu0 %64
  %68 = vset.pattern.permute.xlu0 0
  %69 = vperm.xlu0 %68, %v38
  %v70 = vpop.permute.xlu0 %69
  %73 = vset.pattern.permute.xlu0 0
  %74 = vperm.xlu0 %73, %v39
  %v75 = vpop.permute.xlu0 %74
  %78 = vset.pattern.permute.xlu0 0
  %79 = vperm.xlu0 %78, %v40
  %v80 = vpop.permute.xlu0 %79
  %83 = vset.pattern.permute.xlu0 0
  %84 = vperm.xlu0 %83, %v41
  %v85 = vpop.permute.xlu0 %84
  %88 = vset.pattern.permute.xlu0 0
  %89 = vperm.xlu0 %88, %v42
  %v90 = vpop.permute.xlu0 %89
  %93 = vset.pattern.permute.xlu0 0
  %94 = vperm.xlu0 %93, %v43
  %v95 = vpop.permute.xlu0 %94
  %98 = vset.pattern.permute.xlu0 0
  %99 = vperm.xlu0 %98, %v44
  %v100 = vpop.permute.xlu0 %99
  %103 = vset.pattern.permute.xlu0 0
  %104 = vperm.xlu0 %103, %v45
  %v105 = vpop.permute.xlu0 %104
  %108 = vset.pattern.permute.xlu0 0
  %109 = vperm.xlu0 %108, %v46
  %v110 = vpop.permute.xlu0 %109
  %113 = vset.pattern.permute.xlu0 0
  %114 = vperm.xlu0 %113, %v47
  %v115 = vpop.permute.xlu0 %114
  %118 = vset.pattern.permute.xlu0 0
  %119 = vperm.xlu0 %118, %v48
  %v120 = vpop.permute.xlu0 %119
  %123 = vset.pattern.permute.xlu0 0
  %124 = vperm.xlu0 %123, %v49
  %v125 = vpop.permute.xlu0 %124
  %128 = vset.pattern.permute.xlu0 0
  %129 = vperm.xlu0 %128, %v50
  %v130 = vpop.permute.xlu0 %129
  %v133 = vperm.slane %v51, 0
  %v135 = vadd.f32 %v55, %v133
  %v136 = vadd.f32 %v60, %v133
  %v137 = vadd.f32 %v65, %v133
  %v138 = vadd.f32 %v70, %v133
  %v139 = vadd.f32 %v75, %v133
  %v140 = vadd.f32 %v80, %v133
  %v141 = vadd.f32 %v85, %v133
  %v142 = vadd.f32 %v90, %v133
  %v143 = vadd.f32 %v95, %v133
  %v144 = vadd.f32 %v100, %v133
  %v145 = vadd.f32 %v105, %v133
  %v146 = vadd.f32 %v110, %v133
  %v147 = vadd.f32 %v115, %v133
  %v148 = vadd.f32 %v120, %v133
  %v149 = vadd.f32 %v125, %v133
  %v150 = vadd.f32 %v130, %v133
  %v151 = vtanh.pop %v135
  %v152 = vtanh.pop %v136
  %v153 = vtanh.pop %v137
  %v154 = vtanh.pop %v138
  %v155 = vtanh.pop %v139
  %v156 = vtanh.pop %v140
  %v157 = vtanh.pop %v141
  %v158 = vtanh.pop %v142
  %v159 = vtanh.pop %v143
  %v160 = vtanh.pop %v144
  %v161 = vtanh.pop %v145
  %v162 = vtanh.pop %v146
  %v163 = vtanh.pop %v147
  %v164 = vtanh.pop %v148
  %v165 = vtanh.pop %v149
  %v166 = vtanh.pop %v150
  %v167 = vld [vmem:[%s2] sm:$0x1]
  %v168 = vadd.f32 %v151, 1.0
  %v169 = vadd.f32 %v152, 1.0
  %v170 = vadd.f32 %v153, 1.0
  %v171 = vadd.f32 %v154, 1.0
  %v172 = vadd.f32 %v155, 1.0
  %v173 = vadd.f32 %v156, 1.0
  %v174 = vadd.f32 %v157, 1.0
  %v175 = vadd.f32 %v158, 1.0
  %v176 = vadd.f32 %v159, 1.0
  %v177 = vadd.f32 %v160, 1.0
  %v178 = vadd.f32 %v161, 1.0
  %v179 = vadd.f32 %v162, 1.0
  %v180 = vadd.f32 %v163, 1.0
  %v181 = vadd.f32 %v164, 1.0
  %v182 = vadd.f32 %v165, 1.0
  %v183 = vadd.f32 %v166, 1.0
  %v185 = vperm.slane %v167, 0
  %v187 = vmul.f32 %v185, %v168
  %v188 = vmul.f32 %v185, %v169
  %v189 = vmul.f32 %v185, %v170
  %v190 = vmul.f32 %v185, %v171
  %v191 = vmul.f32 %v185, %v172
  %v192 = vmul.f32 %v185, %v173
  %v193 = vmul.f32 %v185, %v174
  %v194 = vmul.f32 %v185, %v175
  %v195 = vmul.f32 %v185, %v176
  %v196 = vmul.f32 %v185, %v177
  %v197 = vmul.f32 %v185, %v178
  %v198 = vmul.f32 %v185, %v179
  %v199 = vmul.f32 %v185, %v180
  %v200 = vmul.f32 %v185, %v181
  %v201 = vmul.f32 %v185, %v182
  %v202 = vmul.f32 %v185, %v183
  %v203 = vld [vmem:[#allocation2] sm:$0xff]
  %v204 = vld [vmem:[#allocation2 + $0x8] sm:$0xff]
  %v205 = vld [vmem:[#allocation2 + $0x10] sm:$0xff]
  %v206 = vld [vmem:[#allocation2 + $0x18] sm:$0xff]
  %v207 = vld [vmem:[#allocation2 + $0x20] sm:$0xff]
  %v208 = vld [vmem:[#allocation2 + $0x28] sm:$0xff]
  %v209 = vld [vmem:[#allocation2 + $0x30] sm:$0xff]
  %v210 = vld [vmem:[#allocation2 + $0x38] sm:$0xff]
  %v211 = vld [vmem:[#allocation2 + $0x40] sm:$0xff]
  %v212 = vld [vmem:[#allocation2 + $0x48] sm:$0xff]
  %v213 = vld [vmem:[#allocation2 + $0x50] sm:$0xff]
  %v214 = vld [vmem:[#allocation2 + $0x58] sm:$0xff]
  %v215 = vld [vmem:[#allocation2 + $0x60] sm:$0xff]
  %v216 = vld [vmem:[#allocation2 + $0x68] sm:$0xff]
  %v217 = vld [vmem:[#allocation2 + $0x70] sm:$0xff]
  %v218 = vld [vmem:[#allocation2 + $0x78] sm:$0xff]
  %219 = vmax.xlane.f32.xlu0 %v187
  %v220 = vpop.xlane.xlu0 %219
  %221 = vmax.xlane.f32.xlu0 %v188
  %v222 = vpop.xlane.xlu0 %221
  %223 = vmax.xlane.f32.xlu0 %v189
  %v224 = vpop.xlane.xlu0 %223
  %225 = vmax.xlane.f32.xlu0 %v190
  %v226 = vpop.xlane.xlu0 %225
  %227 = vmax.xlane.f32.xlu0 %v191
  %v228 = vpop.xlane.xlu0 %227
  %229 = vmax.xlane.f32.xlu0 %v192
  %v230 = vpop.xlane.xlu0 %229
  %231 = vmax.xlane.f32.xlu0 %v193
  %v232 = vpop.xlane.xlu0 %231
  %233 = vmax.xlane.f32.xlu0 %v194
  %v234 = vpop.xlane.xlu0 %233
  %235 = vmax.xlane.f32.xlu0 %v195
  %v236 = vpop.xlane.xlu0 %235
  %237 = vmax.xlane.f32.xlu0 %v196
  %v238 = vpop.xlane.xlu0 %237
  %239 = vmax.xlane.f32.xlu0 %v197
  %v240 = vpop.xlane.xlu0 %239
  %241 = vmax.xlane.f32.xlu0 %v198
  %v242 = vpop.xlane.xlu0 %241
  %243 = vmax.xlane.f32.xlu0 %v199
  %v244 = vpop.xlane.xlu0 %243
  %245 = vmax.xlane.f32.xlu0 %v200
  %v246 = vpop.xlane.xlu0 %245
  %247 = vmax.xlane.f32.xlu0 %v201
  %v248 = vpop.xlane.xlu0 %247
  %249 = vmax.xlane.f32.xlu0 %v202
  %v250 = vpop.xlane.xlu0 %249
  %v251 = vmax.f32 %v203, %v220
  %v252 = vmax.f32 %v204, %v222
  %v253 = vmax.f32 %v205, %v224
  %v254 = vmax.f32 %v206, %v226
  %v255 = vmax.f32 %v207, %v228
  %v256 = vmax.f32 %v208, %v230
  %v257 = vmax.f32 %v209, %v232
  %v258 = vmax.f32 %v210, %v234
  %v259 = vmax.f32 %v211, %v236
  %v260 = vmax.f32 %v212, %v238
  %v261 = vmax.f32 %v213, %v240
  %v262 = vmax.f32 %v214, %v242
  %v263 = vmax.f32 %v215, %v244
  %v264 = vmax.f32 %v216, %v246
  %v265 = vmax.f32 %v217, %v248
  %v266 = vmax.f32 %v218, %v250
  %vm267 = vcmask 7168
  %268 = vst.msk [vmem:[#allocation2] sm:$0xff] %vm267, %v251
  %269 = vst.msk [vmem:[#allocation2 + $0x8] sm:$0xff] %vm267, %v252
  %270 = vst.msk [vmem:[#allocation2 + $0x10] sm:$0xff] %vm267, %v253
  %271 = vst.msk [vmem:[#allocation2 + $0x18] sm:$0xff] %vm267, %v254
  %272 = vst.msk [vmem:[#allocation2 + $0x20] sm:$0xff] %vm267, %v255
  %273 = vst.msk [vmem:[#allocation2 + $0x28] sm:$0xff] %vm267, %v256
  %274 = vst.msk [vmem:[#allocation2 + $0x30] sm:$0xff] %vm267, %v257
  %275 = vst.msk [vmem:[#allocation2 + $0x38] sm:$0xff] %vm267, %v258
  %276 = vst.msk [vmem:[#allocation2 + $0x40] sm:$0xff] %vm267, %v259
  %277 = vst.msk [vmem:[#allocation2 + $0x48] sm:$0xff] %vm267, %v260
  %278 = vst.msk [vmem:[#allocation2 + $0x50] sm:$0xff] %vm267, %v261
  %279 = vst.msk [vmem:[#allocation2 + $0x58] sm:$0xff] %vm267, %v262
  %280 = vst.msk [vmem:[#allocation2 + $0x60] sm:$0xff] %vm267, %v263
  %281 = vst.msk [vmem:[#allocation2 + $0x68] sm:$0xff] %vm267, %v264
  %282 = vst.msk [vmem:[#allocation2 + $0x70] sm:$0xff] %vm267, %v265
  %283 = vst.msk [vmem:[#allocation2 + $0x78] sm:$0xff] %vm267, %v266
  // Predicated region
  $region18: #{_lambda_.4} parent=0 // pred_check
    %p284 = pneg %p14
  $region19: #{_lambda_.4} parent=0 // pred_check_branch
    %286 = sbr.rel (%p284) target = $region21
  $region20: #{_lambda_.4} parent=0 // pred_region
    %v287 = vld [vmem:[#allocation2] sm:$0xff]
    %v288 = vld [vmem:[#allocation2 + $0x8] sm:$0xff]
    %v289 = vld [vmem:[#allocation2 + $0x10] sm:$0xff]
    %v290 = vld [vmem:[#allocation2 + $0x18] sm:$0xff]
    %v291 = vld [vmem:[#allocation2 + $0x20] sm:$0xff]
    %v292 = vld [vmem:[#allocation2 + $0x28] sm:$0xff]
    %v293 = vld [vmem:[#allocation2 + $0x30] sm:$0xff]
    %v294 = vld [vmem:[#allocation2 + $0x38] sm:$0xff]
    %v295 = vld [vmem:[#allocation2 + $0x40] sm:$0xff]
    %v296 = vld [vmem:[#allocation2 + $0x48] sm:$0xff]
    %v297 = vld [vmem:[#allocation2 + $0x50] sm:$0xff]
    %v298 = vld [vmem:[#allocation2 + $0x58] sm:$0xff]
    %v299 = vld [vmem:[#allocation2 + $0x60] sm:$0xff]
    %v300 = vld [vmem:[#allocation2 + $0x68] sm:$0xff]
    %v301 = vld [vmem:[#allocation2 + $0x70] sm:$0xff]
    %v302 = vld [vmem:[#allocation2 + $0x78] sm:$0xff]
    %303 = vst.msk [vmem:[%s3] sm:$0xff] %vm267, %v287
    %304 = vst.msk [vmem:[%s3 + $0x8] sm:$0xff] %vm267, %v288
    %305 = vst.msk [vmem:[%s3 + $0x10] sm:$0xff] %vm267, %v289
    %306 = vst.msk [vmem:[%s3 + $0x18] sm:$0xff] %vm267, %v290
    %307 = vst.msk [vmem:[%s3 + $0x20] sm:$0xff] %vm267, %v291
    %308 = vst.msk [vmem:[%s3 + $0x28] sm:$0xff] %vm267, %v292
    %309 = vst.msk [vmem:[%s3 + $0x30] sm:$0xff] %vm267, %v293
    %310 = vst.msk [vmem:[%s3 + $0x38] sm:$0xff] %vm267, %v294
    %311 = vst.msk [vmem:[%s3 + $0x40] sm:$0xff] %vm267, %v295
    %312 = vst.msk [vmem:[%s3 + $0x48] sm:$0xff] %vm267, %v296
    %313 = vst.msk [vmem:[%s3 + $0x50] sm:$0xff] %vm267, %v297
    %314 = vst.msk [vmem:[%s3 + $0x58] sm:$0xff] %vm267, %v298
    %315 = vst.msk [vmem:[%s3 + $0x60] sm:$0xff] %vm267, %v299
    %316 = vst.msk [vmem:[%s3 + $0x68] sm:$0xff] %vm267, %v300
    %317 = vst.msk [vmem:[%s3 + $0x70] sm:$0xff] %vm267, %v301
    %318 = vst.msk [vmem:[%s3 + $0x78] sm:$0xff] %vm267, %v302
  $region21: #{_lambda_.4} parent=0 // pred_fallthru
    _
  // Predicated region
  $region22: #{_lambda_.4} parent=0 // pred_check
    _
  $region23: #{_lambda_.4} parent=0 // pred_check_branch
    %320 = sbr.rel (0) target = $region25
  $region24: #{_lambda_.4} parent=0 // pred_region
    _
  $region25: #{_lambda_.4} parent=0 // pred_fallthru
    _
  // Predicated region
  $region26: #{_lambda_.4} parent=0 // pred_check
    _
  $region27: #{_lambda_.4} parent=0 // pred_check_branch
    %322 = sbr.rel (0) target = $region29
  $region28: #{_lambda_.4} parent=0 // pred_region
    _
  $region29: #{_lambda_.4} parent=0 // pred_fallthru
    _

// kernel: _lambda_.3
$region0: #{_lambda_.3}
  #allocation0 [shape = 'u32[]', space=smem, size = 0x4, offset = 0x4, fixed_abs, tag = 'smem constant byte address 0x4 - core index']
  #allocation1 [shape = 'u32[72,128]{1,0:T(1,128)}', space=vmem, size = 0x9000, scoped, tag = 'internal scratch']
  %s0 = inlined_call_operand.vmem [shape: f32[128,32], index: 0, kind: input, shape index: {}]
  %s1 = inlined_call_operand.vmem [shape: f32[32,2], index: 1, kind: input, shape index: {}]
  %s2 = inlined_call_operand.vmem [shape: f32[128,2], index: 2, kind: output, shape index: {}]
  %s3 = sld [smem:[#allocation0]]
  $region18: #{_lambda_.3} parent=0
    _
  %s5 = ssub.s32 1, %s3
  %s6 = scalar_select 0, %s5, %s3
  // Predicated region
  $region2: #{_lambda_.3} parent=0 // pred_check
    _
  $region3: #{_lambda_.3} parent=0 // pred_check_branch
    %8 = sbr.rel (0) target = $region5
  $region4: #{_lambda_.3} parent=0 // pred_region
    _
  $region5: #{_lambda_.3} parent=0 // pred_fallthru
    _
  // Predicated region
  $region6: #{_lambda_.3} parent=0 // pred_check
    _
  $region7: #{_lambda_.3} parent=0 // pred_check_branch
    %10 = sbr.rel (0) target = $region9
  $region8: #{_lambda_.3} parent=0 // pred_region
    _
  $region9: #{_lambda_.3} parent=0 // pred_fallthru
    _
  %v11 = vld [vmem:[%s0] sm:$0xff]
  %v12 = vld [vmem:[%s0 + $0x8] sm:$0xff]
  %v13 = vld [vmem:[%s0 + $0x10] sm:$0xff]
  %v14 = vld [vmem:[%s0 + $0x18] sm:$0xff]
  %v15 = vld [vmem:[%s0 + $0x20] sm:$0xff]
  %v16 = vld [vmem:[%s0 + $0x28] sm:$0xff]
  %v17 = vld [vmem:[%s0 + $0x30] sm:$0xff]
  %v18 = vld [vmem:[%s0 + $0x38] sm:$0xff]
  %v19 = vld [vmem:[%s0 + $0x40] sm:$0xff]
  %v20 = vld [vmem:[%s0 + $0x48] sm:$0xff]
  %v21 = vld [vmem:[%s0 + $0x50] sm:$0xff]
  %v22 = vld [vmem:[%s0 + $0x58] sm:$0xff]
  %v23 = vld [vmem:[%s0 + $0x60] sm:$0xff]
  %v24 = vld [vmem:[%s0 + $0x68] sm:$0xff]
  %v25 = vld [vmem:[%s0 + $0x70] sm:$0xff]
  %v26 = vld [vmem:[%s0 + $0x78] sm:$0xff]
  %v27 = vld [vmem:[%s1] sm:$0xff]
  %v28 = vld [vmem:[%s1 + $0x8] sm:$0xff]
  %v29 = vld [vmem:[%s1 + $0x10] sm:$0xff]
  %v30 = vld [vmem:[%s1 + $0x18] sm:$0xff]
  %vm31 = vcmask 261120
  %v33 = vsel %vm31, %v11, 0
  %v36 = vsel %vm31, %v12, 0
  %v39 = vsel %vm31, %v13, 0
  %v42 = vsel %vm31, %v14, 0
  %v45 = vsel %vm31, %v15, 0
  %v48 = vsel %vm31, %v16, 0
  %v51 = vsel %vm31, %v17, 0
  %v54 = vsel %vm31, %v18, 0
  %v57 = vsel %vm31, %v19, 0
  %v60 = vsel %vm31, %v20, 0
  %v63 = vsel %vm31, %v21, 0
  %v66 = vsel %vm31, %v22, 0
  %v69 = vsel %vm31, %v23, 0
  %v72 = vsel %vm31, %v24, 0
  %v75 = vsel %vm31, %v25, 0
  %v78 = vsel %vm31, %v26, 0
  %80 = vmatpush.msra.mxu0 0.0
  %81 = vmatpush.msra.mxu0 0.0
  %82 = vmatpush.msra.mxu0 0.0
  %83 = vmatpush.msra.mxu0 0.0
  %84 = vmatpush.msra.mxu0 0.0
  %85 = vmatpush.msra.mxu0 0.0
  %86 = vmatpush.msra.mxu0 0.0
  %87 = vmatpush.msra.mxu0 0.0
  %88 = vmatpush.msra.mxu0 0.0
  %89 = vmatpush.msra.mxu0 0.0
  %90 = vmatpush.msra.mxu0 0.0
  %91 = vmatpush.msra.mxu0 0.0
  %92 = vmatpush.msra.mxu0 %v30
  %93 = vmatpush.msra.mxu0 %v29
  %94 = vmatpush.msra.mxu0 %v28
  %95 = vmatpush.msra.mxu0 %v27
  %96 = vmatmul.f32.gmra.mxu0 %v33
  %v97 = vpop.f32.mrf.mxu0
  %v98 = vadd.f32 0.0, %v97
  %99 = vmatmul.f32.gmra.mxu0 %v36
  %v100 = vpop.f32.mrf.mxu0
  %v101 = vadd.f32 0.0, %v100
  %102 = vmatmul.f32.gmra.mxu0 %v39
  %v103 = vpop.f32.mrf.mxu0
  %v104 = vadd.f32 0.0, %v103
  %105 = vmatmul.f32.gmra.mxu0 %v42
  %v106 = vpop.f32.mrf.mxu0
  %v107 = vadd.f32 0.0, %v106
  %108 = vmatmul.f32.gmra.mxu0 %v45
  %v109 = vpop.f32.mrf.mxu0
  %v110 = vadd.f32 0.0, %v109
  %111 = vmatmul.f32.gmra.mxu0 %v48
  %v112 = vpop.f32.mrf.mxu0
  %v113 = vadd.f32 0.0, %v112
  %114 = vmatmul.f32.gmra.mxu0 %v51
  %v115 = vpop.f32.mrf.mxu0
  %v116 = vadd.f32 0.0, %v115
  %117 = vmatmul.f32.gmra.mxu0 %v54
  %v118 = vpop.f32.mrf.mxu0
  %v119 = vadd.f32 0.0, %v118
  %120 = vmatmul.f32.gmra.mxu0 %v57
  %v121 = vpop.f32.mrf.mxu0
  %v122 = vadd.f32 0.0, %v121
  %123 = vmatmul.f32.gmra.mxu0 %v60
  %v124 = vpop.f32.mrf.mxu0
  %v125 = vadd.f32 0.0, %v124
  %126 = vmatmul.f32.gmra.mxu0 %v63
  %v127 = vpop.f32.mrf.mxu0
  %v128 = vadd.f32 0.0, %v127
  %129 = vmatmul.f32.gmra.mxu0 %v66
  %v130 = vpop.f32.mrf.mxu0
  %v131 = vadd.f32 0.0, %v130
  %132 = vmatmul.f32.gmra.mxu0 %v69
  %v133 = vpop.f32.mrf.mxu0
  %v134 = vadd.f32 0.0, %v133
  %135 = vmatmul.f32.gmra.mxu0 %v72
  %v136 = vpop.f32.mrf.mxu0
  %v137 = vadd.f32 0.0, %v136
  %138 = vmatmul.f32.gmra.mxu0 %v75
  %v139 = vpop.f32.mrf.mxu0
  %v140 = vadd.f32 0.0, %v139
  %141 = vmatmul.f32.gmra.mxu0 %v78
  %v142 = vpop.f32.mrf.mxu0
  %v143 = vadd.f32 0.0, %v142
  %144 = vdwg.mxu0
  %vm145 = vcmask 15360
  %146 = vst.msk [vmem:[%s2] sm:$0xff] %vm145, %v98
  %147 = vst.msk [vmem:[%s2 + $0x8] sm:$0xff] %vm145, %v101
  %148 = vst.msk [vmem:[%s2 + $0x10] sm:$0xff] %vm145, %v104
  %149 = vst.msk [vmem:[%s2 + $0x18] sm:$0xff] %vm145, %v107
  %150 = vst.msk [vmem:[%s2 + $0x20] sm:$0xff] %vm145, %v110
  %151 = vst.msk [vmem:[%s2 + $0x28] sm:$0xff] %vm145, %v113
  %152 = vst.msk [vmem:[%s2 + $0x30] sm:$0xff] %vm145, %v116
  %153 = vst.msk [vmem:[%s2 + $0x38] sm:$0xff] %vm145, %v119
  %154 = vst.msk [vmem:[%s2 + $0x40] sm:$0xff] %vm145, %v122
  %155 = vst.msk [vmem:[%s2 + $0x48] sm:$0xff] %vm145, %v125
  %156 = vst.msk [vmem:[%s2 + $0x50] sm:$0xff] %vm145, %v128
  %157 = vst.msk [vmem:[%s2 + $0x58] sm:$0xff] %vm145, %v131
  %158 = vst.msk [vmem:[%s2 + $0x60] sm:$0xff] %vm145, %v134
  %159 = vst.msk [vmem:[%s2 + $0x68] sm:$0xff] %vm145, %v137
  %160 = vst.msk [vmem:[%s2 + $0x70] sm:$0xff] %vm145, %v140
  %161 = vst.msk [vmem:[%s2 + $0x78] sm:$0xff] %vm145, %v143
  // Predicated region
  $region10: #{_lambda_.3} parent=0 // pred_check
    _
  $region11: #{_lambda_.3} parent=0 // pred_check_branch
    %163 = sbr.rel (0) target = $region13
  $region12: #{_lambda_.3} parent=0 // pred_region
    _
  $region13: #{_lambda_.3} parent=0 // pred_fallthru
    _
  // Predicated region
  $region14: #{_lambda_.3} parent=0 // pred_check
    _
  $region15: #{_lambda_.3} parent=0 // pred_check_branch
    %165 = sbr.rel (0) target = $region17
  $region16: #{_lambda_.3} parent=0 // pred_region
    _
  $region17: #{_lambda_.3} parent=0 // pred_fallthru
    _

</llo_original>
